<compile_context>
chip_gen: v7x
topology: tpu7x:2x2x1
jax: 0.10.0
libtpu: 0.0.40
codegen_flags: <defaults>
</compile_context>

<pallas_src>
import jax
import jax.numpy as jnp
from jax.experimental import pallas as pl
from jax.experimental.pallas import tpu as pltpu


def _round_up(x, m):
    return ((x + m - 1) // m) * m


# ----------------------------- Tile selection ---------------------------------
_MAX_TILE_S = 32768      # ~12.6 MiB double-buffered f32 in+out per step
_MIN_TILE_S = 8192       # keep per-step DMA well above the ~0.35us fixed overhead
_TARGET_GRID_STEPS = 32  # >= ~16 steps per TensorCore on dual-core parts


def _choose_tile_s(S, N):
    """Lane-dense spatial tile: big enough to amortize per-step overhead, small
    enough to keep ~TARGET grid steps and fit comfortably in VMEM."""
    steps_per_batch = max(1, -(-_TARGET_GRID_STEPS // max(N, 1)))
    t = -(-S // steps_per_batch)                  # ceil(S / steps_per_batch)
    t = _round_up(max(t, _MIN_TILE_S), 128)
    t = min(t, _MAX_TILE_S)
    if t >= S:
        return S                                   # single full block per batch elem
    return t


# ----------------------------- Pallas kernel ---------------------------------
def _focus_pointwise_kernel(x_ref, w_ref, b_ref, o_ref):
    # x_ref: (1, Cin, Ts)   channels-first spatial tile (Cin = 12)
    # w_ref: (Cout, Cin)    BN-folded 1x1 conv weight, transposed
    # b_ref: (Cout, 1)      BN-folded bias (broadcasts along lanes)
    # o_ref: (1, Cout, Ts)  lane-dense output tile
    acc = jnp.dot(w_ref[...], x_ref[0], preferred_element_type=jnp.float32)
    acc = acc + b_ref[...]                                      # folded BN shift
    o_ref[0] = (acc * jax.nn.sigmoid(acc)).astype(o_ref.dtype)  # SiLU


def focus_pointwise_conv(xc, w_t, b_col, *, tile_s=None, out_dtype=None,
                         core_parallel=False):
    """xc: (N, Cin, S) channels-first; w_t: (Cout, Cin); b_col: (Cout, 1)."""
    N, Cin, S = xc.shape
    Cout = w_t.shape[0]
    out_dtype = xc.dtype if out_dtype is None else jnp.dtype(out_dtype)
    out_itemsize = jnp.dtype(out_dtype).itemsize

    if tile_s is None:
        tile_s = _choose_tile_s(S, N)
    grid = (N, pl.cdiv(S, tile_s))   # ragged tail handled as a partial block

    # Advisory cost: true source bytes (x and xc have identical element counts),
    # tiny weights, and the output - this op is pure HBM bandwidth.
    cost = pl.CostEstimate(
        flops=int(2 * N * S * Cin * Cout + 4 * N * S * Cout),
        transcendentals=int(N * S * Cout),
        bytes_accessed=int(
            xc.size * xc.dtype.itemsize
            + w_t.size * w_t.dtype.itemsize
            + b_col.size * b_col.dtype.itemsize
            + N * Cout * S * out_itemsize
        ),
    )

    # VMEM: double-buffered input (12 sublanes pad to 16) + output tiles, plus
    # generous headroom for Mosaic-internal scratch.  Explicit so v5e's 16 MiB
    # scoped default never gates the 32768-lane tile; well under every gen's
    # physical VMEM.
    in_blk = _round_up(Cin, 8) * tile_s * xc.dtype.itemsize
    out_blk = _round_up(Cout, 8) * tile_s * out_itemsize
    vmem_limit = int(2 * (in_blk + out_blk) + 8 * (2 ** 20))

    if core_parallel:
        # Shard the batch axis across TensorCores (v7x has 2 per chip).
        dim_sems = (pltpu.CORE_PARALLEL, "parallel")
    else:
        dim_sems = ("parallel", "parallel")

    out = pl.pallas_call(
        _focus_pointwise_kernel,
        out_shape=jax.ShapeDtypeStruct((N, Cout, S), out_dtype),
        grid_spec=pltpu.PrefetchScalarGridSpec(
            num_scalar_prefetch=0,
            grid=grid,
            in_specs=[
                pl.BlockSpec((1, Cin, tile_s), lambda n, s: (n, 0, s)),
                pl.BlockSpec((Cout, Cin), lambda n, s: (0, 0)),
                pl.BlockSpec((Cout, 1), lambda n, s: (0, 0)),
            ],
            out_specs=pl.BlockSpec((1, Cout, tile_s), lambda n, s: (n, 0, s)),
        ),
        compiler_params=pltpu.CompilerParams(
            dimension_semantics=dim_sems,
            vmem_limit_bytes=vmem_limit,
            # Best-effort: let XLA try to fuse the space-to-depth producer into
            # the kernel's input read.  Not relied upon for correctness or for
            # the cost model (see module-level TODO).
            allow_input_fusion=[True, False, False],
        ),
        cost_estimate=cost,
    )(xc, w_t, b_col)
    return out


# ----------------------------- Module wrapper ---------------------------------
def surrogate_focus_forward(x_nchw, w_folded, b_folded, *, tile_s=None,
                            out_dtype=None, core_parallel=False):
    """x_nchw: (N, 3, H, W) -> (N, c2, H//2, W//2).
    w_folded: (12, c2) BN-folded 1x1 weight; b_folded: (1, c2) BN-folded bias."""
    N, C, H, W = x_nchw.shape
    assert C == 3, "surrogate_focus uses fixed 3-channel grouped 2x2 convs"
    Hh, Wh = H // 2, W // 2
    if H % 2 or W % 2:   # match stride-2 conv flooring on odd inputs
        x_nchw = x_nchw[:, :, : 2 * Hh, : 2 * Wh]

    # conv1..conv4 (frozen 2x2 stride-2 grouped convs) == space-to-depth pixel
    # selection, done channels-first so the kernel's lane axis is already the
    # NCHW minor (flat HhxWh) axis.  This producer is left to XLA; see TODO.
    x6 = x_nchw.reshape(N, C, Hh, 2, Wh, 2)
    xc = jnp.concatenate(
        [x6[:, :, :, 0, :, 0],   # conv1: TL
         x6[:, :, :, 1, :, 0],   # conv2: BL
         x6[:, :, :, 0, :, 1],   # conv3: TR
         x6[:, :, :, 1, :, 1]],  # conv4: BR
        axis=1,
    ).reshape(N, 4 * C, Hh * Wh)                               # (N, 12, S)

    w_t = jnp.transpose(w_folded)                              # (c2, 12)
    b_col = jnp.transpose(b_folded)                            # (c2, 1)
    out = focus_pointwise_conv(xc, w_t, b_col, tile_s=tile_s,
                               out_dtype=out_dtype, core_parallel=core_parallel)
    c2 = w_folded.shape[1]
    return out.reshape(N, c2, Hh, Wh)                          # already NCHW


def make_params(key, c1=3, c2=32, eps=1e-3):
    """Deterministic synthetic params: 1x1 conv weight + BatchNorm, BN folded."""
    cin = c1 * 4
    k_w, k_g, k_b, k_m, k_v = jax.random.split(key, 5)
    conv_w = jax.random.normal(k_w, (c2, cin), jnp.float32) * (1.0 / jnp.sqrt(cin))
    conv_w = conv_w.T                                          # (cin, c2)
    gamma = 1.0 + 0.1 * jax.random.normal(k_g, (c2,), jnp.float32)
    beta = 0.1 * jax.random.normal(k_b, (c2,), jnp.float32)
    running_mean = 0.1 * jax.random.normal(k_m, (c2,), jnp.float32)
    running_var = jnp.abs(1.0 + 0.1 * jax.random.normal(k_v, (c2,), jnp.float32))
    # Fold BN (eval mode): y = (x@W - mean)*g/sqrt(v+eps) + beta
    scale = gamma / jnp.sqrt(running_var + eps)                # (c2,)
    w_folded = conv_w * scale[None, :]                         # (cin, c2)
    b_folded = (beta - running_mean * scale)[None, :]          # (1, c2)
    return w_folded, b_folded


# ----------------------------- Reference (pure JAX) ---------------------------
def _reference(x_nchw, w_folded, b_folded):
    tl = x_nchw[:, :, 0::2, 0::2]
    bl = x_nchw[:, :, 1::2, 0::2]
    tr = x_nchw[:, :, 0::2, 1::2]
    br = x_nchw[:, :, 1::2, 1::2]
    xc = jnp.concatenate([tl, bl, tr, br], axis=1)
    y = jnp.einsum("nchw,cd->ndhw", xc, w_folded) + b_folded[0][None, :, None, None]
    return y * jax.nn.sigmoid(y)


if __name__ == "__main__":
    key = jax.random.PRNGKey(0)
    k_x, k_p = jax.random.split(key)
    N, C, H, W = 2, 3, 16, 16            # C must be 3 (fixed groups=3 convs)
    c2 = 32
    x = jax.random.normal(k_x, (N, C, H, W), jnp.float32)
    w_folded, b_folded = make_params(k_p, c1=C, c2=c2)

    fwd = jax.jit(surrogate_focus_forward)
    out = jax.block_until_ready(fwd(x, w_folded, b_folded))

    ref = _reference(x, w_folded, b_folded)
    assert out.shape == (N, c2, H // 2, W // 2), out.shape
    assert jnp.allclose(out, ref, atol=1e-4, rtol=1e-4), "mismatch vs reference"
    print("KERNEL_OK")
</pallas_src>

<mosaic_0001>
module attributes {stable_mosaic.version = 11 : i64} {
  func.func @_focus_pointwise_kernel(%arg0: i32, %arg1: i32, %arg2: memref<1x12x64xf32, #tpu.memory_space<vmem>>, %arg3: memref<32x12xf32, #tpu.memory_space<vmem>>, %arg4: memref<32x1xf32, #tpu.memory_space<vmem>>, %arg5: memref<1x32x64xf32, #tpu.memory_space<vmem>>) attributes {dimension_semantics = [#tpu.dimension_semantics<parallel>, #tpu.dimension_semantics<parallel>], iteration_bounds = array<i64: 2, 1>, scalar_prefetch = 0 : i64, scratch_operands = 0 : i64, tpu.core_type = #tpu.core_type<tc>, window_params = [{transform_indices = @transform_0, window_bounds = array<i64: 1, 12, 64>}, {pipeline_mode = #tpu.pipeline_mode<synchronous>, transform_indices = @transform_1, window_bounds = array<i64: 32, 12>}, {pipeline_mode = #tpu.pipeline_mode<synchronous>, transform_indices = @transform_2, window_bounds = array<i64: 32, 1>}, {transform_indices = @transform_3, window_bounds = array<i64: 1, 32, 64>}]} {
    %c0 = arith.constant 0 : index
    %c0_0 = arith.constant 0 : index
    %0 = vector.load %arg3[%c0, %c0_0] : memref<32x12xf32, #tpu.memory_space<vmem>>, vector<32x12xf32>
    %c0_1 = arith.constant 0 : index
    %c0_2 = arith.constant 0 : index
    %c0_3 = arith.constant 0 : index
    %1 = vector.load %arg2[%c0_1, %c0_2, %c0_3] : memref<1x12x64xf32, #tpu.memory_space<vmem>>, vector<1x12x64xf32>
    %2 = vector.shape_cast %1 : vector<1x12x64xf32> to vector<12x64xf32>
    %cst = arith.constant dense<0.000000e+00> : vector<32x64xf32>
    %3 = tpu.matmul %0, %2, %cst {dimension_numbers = #tpu.dot_dimension_numbers<[1], [0], [0], [1], [0, 0, 1, 1], [], []>} : vector<32x12xf32>, vector<12x64xf32>, vector<32x64xf32> -> vector<32x64xf32>
    %c0_4 = arith.constant 0 : index
    %c0_5 = arith.constant 0 : index
    %4 = vector.load %arg4[%c0_4, %c0_5] : memref<32x1xf32, #tpu.memory_space<vmem>>, vector<32x1xf32>
    %5 = vector.broadcast %4 : vector<32x1xf32> to vector<32x64xf32>
    %6 = arith.addf %3, %5 : vector<32x64xf32>
    %7 = arith.negf %6 : vector<32x64xf32>
    %8 = math.exp %7 : vector<32x64xf32>
    %cst_6 = arith.constant 1.000000e+00 : f32
    %9 = vector.broadcast %cst_6 : f32 to vector<32x64xf32>
    %10 = arith.addf %9, %8 : vector<32x64xf32>
    %11 = arith.divf %9, %10 : vector<32x64xf32>
    %12 = arith.mulf %6, %11 : vector<32x64xf32>
    %c0_7 = arith.constant 0 : index
    %c0_8 = arith.constant 0 : index
    %c0_9 = arith.constant 0 : index
    %13 = vector.load %arg5[%c0_7, %c0_8, %c0_9] : memref<1x32x64xf32, #tpu.memory_space<vmem>>, vector<1x32x64xf32>
    %14 = vector.shape_cast %13 : vector<1x32x64xf32> to vector<32x64xf32>
    %15 = vector.shape_cast %12 : vector<32x64xf32> to vector<1x32x64xf32>
    tpu.vector_store %arg5[%c0_7, %c0_8, %c0_9], %15 {strides = array<i32>} : memref<1x32x64xf32, #tpu.memory_space<vmem>>, vector<1x32x64xf32>,
    return
  }
  func.func @transform_0(%arg0: i32, %arg1: i32) -> (i32, i32, i32) {
    %c0_i32 = arith.constant 0 : i32
    %c0_i32_0 = arith.constant 0 : i32
    return %arg0, %c0_i32, %arg1 : i32, i32, i32
  }
  func.func @transform_1(%arg0: i32, %arg1: i32) -> (i32, i32) {
    %c0_i32 = arith.constant 0 : i32
    %c0_i32_0 = arith.constant 0 : i32
    %c0_i32_1 = arith.constant 0 : i32
    return %c0_i32, %c0_i32_0 : i32, i32
  }
  func.func @transform_2(%arg0: i32, %arg1: i32) -> (i32, i32) {
    %c0_i32 = arith.constant 0 : i32
    %c0_i32_0 = arith.constant 0 : i32
    %c0_i32_1 = arith.constant 0 : i32
    return %c0_i32, %c0_i32_0 : i32, i32
  }
  func.func @transform_3(%arg0: i32, %arg1: i32) -> (i32, i32, i32) {
    %c0_i32 = arith.constant 0 : i32
    %c0_i32_0 = arith.constant 0 : i32
    return %arg0, %c0_i32, %arg1 : i32, i32, i32
  }
}

</mosaic_0001>

<llo_original>
// kernel: surrogate_focus_forward.2
$region0: #{surrogate_focus_forward.2}
  #allocation0 [shape = 'u32[]', space=smem, size = 0x4, offset = 0x4, fixed_abs, tag = 'smem constant byte address 0x4 - core index']
  #allocation1 [shape = 'u32[144,128]{1,0:T(1,128)}', space=vmem, size = 0x12000, scoped, tag = 'internal scratch']
  #allocation2 [shape = 'u32[2048]{0}', space=vmem, size = 0x2000, scoped, tag = 'scoped memory for surrogate_focus_forward.2']
  #allocation3 [shape = 'u32[2048]{0}', space=vmem, size = 0x2000, scoped, tag = 'scoped memory for surrogate_focus_forward.2']
  #allocation4 [shape = 'u32[2048]{0}', space=vmem, size = 0x2000, scoped, tag = 'scoped memory for surrogate_focus_forward.2']
  #allocation5 [shape = 'u32[2048]{0}', space=vmem, size = 0x2000, scoped, tag = 'scoped memory for surrogate_focus_forward.2']
  #allocation6 [shape = 'u32[2048]{0}', space=vmem, size = 0x2000, scoped, tag = 'scoped memory for surrogate_focus_forward.2']
  #allocation7 [shape = 'u32[2048]{0}', space=vmem, size = 0x2000, scoped, tag = 'scoped memory for surrogate_focus_forward.2']
  #allocation8 [shape = 'u32[2048]{0}', space=vmem, size = 0x2000, scoped, tag = 'scoped memory for surrogate_focus_forward.2']
  #allocation9 [shape = 'u32[2048]{0}', space=vmem, size = 0x2000, scoped, tag = 'scoped memory for surrogate_focus_forward.2']
  #allocation10 [shape = 'u32[2048]{0}', space=vmem, size = 0x2000, scoped, tag = 'scoped memory for surrogate_focus_forward.2']
  #allocation11 [shape = 'u32[2048]{0}', space=vmem, size = 0x2000, scoped, tag = 'scoped memory for surrogate_focus_forward.2']
  #allocation12 [shape = 'u32[2048]{0}', space=vmem, size = 0x2000, scoped, tag = 'scoped memory for surrogate_focus_forward.2']
  #allocation13 [shape = 'u32[2048]{0}', space=vmem, size = 0x2000, scoped, tag = 'scoped memory for surrogate_focus_forward.2']
  #allocation14 [shape = 'u32[2048]{0}', space=vmem, size = 0x2000, scoped, tag = 'scoped memory for surrogate_focus_forward.2']
  #allocation15 [shape = 'u32[2048]{0}', space=vmem, size = 0x2000, scoped, tag = 'scoped memory for surrogate_focus_forward.2']
  #allocation16 [shape = 'u32[2048]{0}', space=vmem, size = 0x2000, scoped, tag = 'scoped memory for surrogate_focus_forward.2']
  #allocation17 [shape = 'u32[2048]{0}', space=vmem, size = 0x2000, scoped, tag = 'scoped memory for surrogate_focus_forward.2']
  #allocation18 [shape = 'u32[2048]{0}', space=vmem, size = 0x2000, scoped, tag = 'scoped memory for surrogate_focus_forward.2']
  #allocation19 [shape = 'u32[2048]{0}', space=vmem, size = 0x2000, scoped, tag = 'scoped memory for surrogate_focus_forward.2']
  #allocation20 [shape = 'u32[2048]{0}', space=vmem, size = 0x2000, scoped, tag = 'scoped memory for surrogate_focus_forward.2']
  #allocation21 [shape = 'u32[2048]{0}', space=vmem, size = 0x2000, scoped, tag = 'scoped memory for surrogate_focus_forward.2']
  %s0 = inlined_call_operand.vmem [shape: f32[32,12], index: 0, kind: input, shape index: {}]
  %s1 = inlined_call_operand.vmem [shape: f32[32,1], index: 1, kind: input, shape index: {}]
  %s2 = inlined_call_operand.vmem [shape: f32[2,3,64], index: 2, kind: input, shape index: {}]
  %s3 = inlined_call_operand.<no memory space> [shape: f32[], index: 3, kind: input, shape index: {}]
  %s4 = inlined_call_operand.vmem [shape: f32[2,3,64], index: 4, kind: input, shape index: {}]
  %s5 = inlined_call_operand.vmem [shape: f32[2,3,64], index: 5, kind: input, shape index: {}]
  %s6 = inlined_call_operand.vmem [shape: f32[2,3,64], index: 6, kind: input, shape index: {}]
  %s7 = inlined_call_operand.vmem [shape: f32[2,32,64], index: 7, kind: output, shape index: {}]
  %s8 = sld [smem:[#allocation0]]
  $region57: #{surrogate_focus_forward.2} parent=0
    _
  %s10 = ssub.s32 1, %s8
  %s11 = scalar_select 0, %s10, %s8
  %v12 = vstv %s3
  %v13 = vstv %s3
  %v14 = vstv %s3
  %v15 = vstv %s3
  loop: start=0, step=1, limit=4
  $region2: #{surrogate_focus_forward.2} parent=0 // loop_pre_header
    _
  $region3: #{surrogate_focus_forward.2} parent=0 // loop_header
    %s17 = sphi 0, %s21
    %p18 = scmp.ge.s32.totalorder %s17, 4
    %s24 = sphi 0, %s36
    %s25 = sphi 0, %s32
    %s26 = sphi 0, %s24
    %s27 = sphi 0, %s25
    %s28 = sphi 0, %s26
    %s29 = sphi 0, %s27
    %s45 = sphi 0, %s47
    %s48 = sphi 0, %s45
    %s49 = sphi 0, %s48
    %s65 = sphi 0, %s49
    %s77 = sphi 0, %s79
    %s80 = sphi 0, %s77
    %s81 = sphi 0, %s80
    %s97 = sphi 0, %s81
    %s109 = sphi 0, %s111
    %s112 = sphi 0, %s109
    %s113 = sphi 0, %s112
    %s129 = sphi 0, %s113
    %s137 = sphi 0, %s139
    %s140 = sphi 0, %s137
    %s141 = sphi 0, %s140
    %s157 = sphi 0, %s141
    %s161 = sphi 0, %s161
    %s163 = sphi 0, %s161
    %s164 = sphi 0, %s163
    %s178 = sphi 0, %s164
    %s182 = sphi 0, %s182
    %s184 = sphi 0, %s182
    %s185 = sphi 0, %s184
    %s199 = sphi 0, %s185
    %s207 = sphi 0, %s209
    %s210 = sphi 0, %s207
    %s211 = sphi 0, %s210
    %s227 = sphi 0, %s211
  $region4: #{surrogate_focus_forward.2} parent=0 // loop_header_branch
    %20 = sbr.rel (%p18) target = $region8
  $region5: #{surrogate_focus_forward.2} parent=0 // loop_body
    %s22 = ssub.s32 %s17, 1
    %s23 = ssub.s32 %s17, 2
    %s30 = sadd.s32 1, %s25
    %p31 = scmp.ge.s32.totalorder %s30, 1
    %s32 = scalar_select %p31, 0, %s30
    %s33 = sadd.s32 1, %s24
    %s34 = scalar_select %p31, %s33, %s24
    %p35 = scmp.ge.s32.totalorder %s34, 2
    %s36 = scalar_select %p35, 0, %s34
    %s39 = ssub.s32 %s24, %s36
    %s40 = ssub.s32 0, 0
    %s41 = sor.u32 %s39, %s40
    %s42 = ssub.s32 %s25, %s32
    %s43 = sor.u32 %s41, %s42
    %p44 = scmp.eq.s32.totalorder %s43, 0
    %s46 = sadd.s32 %s45, 1
    %s47 = scalar_select %p44, %s45, %s46
    %p50 = pneg %p44
    %p51 = scmp.eq.s32.totalorder %s17, 1
    %p52 = por %p50, %p51
    %p53 = scmp.ne.s32.totalorder %s45, %s48
    %p54 = scmp.eq.s32.totalorder %s17, 0
    %p55 = por %p53, %p54
    %p56 = scmp.ne.s32.totalorder %s45, %s48
    %p57 = scmp.eq.s32.totalorder %s22, 1
    %p58 = por %p56, %p57
    %p59 = scmp.ne.s32.totalorder %s48, %s49
    %p60 = scmp.eq.s32.totalorder %s22, 0
    %p61 = por %p59, %p60
    %p62 = scmp.ne.s32.totalorder %s48, %s49
    %p63 = scmp.eq.s32.totalorder %s23, 1
    %p64 = por %p62, %p63
    %p66 = scmp.ne.s32.totalorder %s49, %s65
    %p67 = scmp.eq.s32.totalorder %s23, 0
    %p68 = por %p66, %p67
    %s71 = ssub.s32 %s24, %s36
    %s72 = ssub.s32 0, 0
    %s73 = sor.u32 %s71, %s72
    %s74 = ssub.s32 %s25, %s32
    %s75 = sor.u32 %s73, %s74
    %p76 = scmp.eq.s32.totalorder %s75, 0
    %s78 = sadd.s32 %s77, 1
    %s79 = scalar_select %p76, %s77, %s78
    %p82 = pneg %p76
    %p83 = scmp.eq.s32.totalorder %s17, 1
    %p84 = por %p82, %p83
    %p85 = scmp.ne.s32.totalorder %s77, %s80
    %p86 = scmp.eq.s32.totalorder %s17, 0
    %p87 = por %p85, %p86
    %p88 = scmp.ne.s32.totalorder %s77, %s80
    %p89 = scmp.eq.s32.totalorder %s22, 1
    %p90 = por %p88, %p89
    %p91 = scmp.ne.s32.totalorder %s80, %s81
    %p92 = scmp.eq.s32.totalorder %s22, 0
    %p93 = por %p91, %p92
    %p94 = scmp.ne.s32.totalorder %s80, %s81
    %p95 = scmp.eq.s32.totalorder %s23, 1
    %p96 = por %p94, %p95
    %p98 = scmp.ne.s32.totalorder %s81, %s97
    %p99 = scmp.eq.s32.totalorder %s23, 0
    %p100 = por %p98, %p99
    %s103 = ssub.s32 %s24, %s36
    %s104 = ssub.s32 0, 0
    %s105 = sor.u32 %s103, %s104
    %s106 = ssub.s32 %s25, %s32
    %s107 = sor.u32 %s105, %s106
    %p108 = scmp.eq.s32.totalorder %s107, 0
    %s110 = sadd.s32 %s109, 1
    %s111 = scalar_select %p108, %s109, %s110
    %p114 = pneg %p108
    %p115 = scmp.eq.s32.totalorder %s17, 1
    %p116 = por %p114, %p115
    %p117 = scmp.ne.s32.totalorder %s109, %s112
    %p118 = scmp.eq.s32.totalorder %s17, 0
    %p119 = por %p117, %p118
    %p120 = scmp.ne.s32.totalorder %s109, %s112
    %p121 = scmp.eq.s32.totalorder %s22, 1
    %p122 = por %p120, %p121
    %p123 = scmp.ne.s32.totalorder %s112, %s113
    %p124 = scmp.eq.s32.totalorder %s22, 0
    %p125 = por %p123, %p124
    %p126 = scmp.ne.s32.totalorder %s112, %s113
    %p127 = scmp.eq.s32.totalorder %s23, 1
    %p128 = por %p126, %p127
    %p130 = scmp.ne.s32.totalorder %s113, %s129
    %p131 = scmp.eq.s32.totalorder %s23, 0
    %p132 = por %p130, %p131
    %s133 = ssub.s32 %s24, %s36
    %s134 = ssub.s32 %s25, %s32
    %s135 = sor.u32 %s133, %s134
    %p136 = scmp.eq.s32.totalorder %s135, 0
    %s138 = sadd.s32 %s137, 1
    %s139 = scalar_select %p136, %s137, %s138
    %p142 = pneg %p136
    %p143 = scmp.eq.s32.totalorder %s17, 1
    %p144 = por %p142, %p143
    %p145 = scmp.ne.s32.totalorder %s137, %s140
    %p146 = scmp.eq.s32.totalorder %s17, 0
    %p147 = por %p145, %p146
    %p148 = scmp.ne.s32.totalorder %s137, %s140
    %p149 = scmp.eq.s32.totalorder %s22, 1
    %p150 = por %p148, %p149
    %p151 = scmp.ne.s32.totalorder %s140, %s141
    %p152 = scmp.eq.s32.totalorder %s22, 0
    %p153 = por %p151, %p152
    %p154 = scmp.ne.s32.totalorder %s140, %s141
    %p155 = scmp.eq.s32.totalorder %s23, 1
    %p156 = por %p154, %p155
    %p158 = scmp.ne.s32.totalorder %s141, %s157
    %p159 = scmp.eq.s32.totalorder %s23, 0
    %p160 = por %p158, %p159
    %s162 = sadd.s32 %s161, 1
    %p165 = scmp.eq.s32.totalorder %s17, 1
    %p166 = scmp.ne.s32.totalorder %s161, %s163
    %p167 = scmp.eq.s32.totalorder %s17, 0
    %p168 = por %p166, %p167
    %p169 = scmp.ne.s32.totalorder %s161, %s163
    %p170 = scmp.eq.s32.totalorder %s22, 1
    %p171 = por %p169, %p170
    %p172 = scmp.ne.s32.totalorder %s163, %s164
    %p173 = scmp.eq.s32.totalorder %s22, 0
    %p174 = por %p172, %p173
    %p175 = scmp.ne.s32.totalorder %s163, %s164
    %p176 = scmp.eq.s32.totalorder %s23, 1
    %p177 = por %p175, %p176
    %p179 = scmp.ne.s32.totalorder %s164, %s178
    %p180 = scmp.eq.s32.totalorder %s23, 0
    %p181 = por %p179, %p180
    %s183 = sadd.s32 %s182, 1
    %p186 = scmp.eq.s32.totalorder %s17, 1
    %p187 = scmp.ne.s32.totalorder %s182, %s184
    %p188 = scmp.eq.s32.totalorder %s17, 0
    %p189 = por %p187, %p188
    %p190 = scmp.ne.s32.totalorder %s182, %s184
    %p191 = scmp.eq.s32.totalorder %s22, 1
    %p192 = por %p190, %p191
    %p193 = scmp.ne.s32.totalorder %s184, %s185
    %p194 = scmp.eq.s32.totalorder %s22, 0
    %p195 = por %p193, %p194
    %p196 = scmp.ne.s32.totalorder %s184, %s185
    %p197 = scmp.eq.s32.totalorder %s23, 1
    %p198 = por %p196, %p197
    %p200 = scmp.ne.s32.totalorder %s185, %s199
    %p201 = scmp.eq.s32.totalorder %s23, 0
    %p202 = por %p200, %p201
    %s203 = ssub.s32 %s24, %s36
    %s204 = ssub.s32 %s25, %s32
    %s205 = sor.u32 %s203, %s204
    %p206 = scmp.eq.s32.totalorder %s205, 0
    %s208 = sadd.s32 %s207, 1
    %s209 = scalar_select %p206, %s207, %s208
    %p212 = pneg %p206
    %p213 = scmp.eq.s32.totalorder %s17, 1
    %p214 = por %p212, %p213
    %p215 = scmp.ne.s32.totalorder %s207, %s210
    %p216 = scmp.eq.s32.totalorder %s17, 0
    %p217 = por %p215, %p216
    %p218 = scmp.ne.s32.totalorder %s207, %s210
    %p219 = scmp.eq.s32.totalorder %s22, 1
    %p220 = por %p218, %p219
    %p221 = scmp.ne.s32.totalorder %s210, %s211
    %p222 = scmp.eq.s32.totalorder %s22, 0
    %p223 = por %p221, %p222
    %p224 = scmp.ne.s32.totalorder %s210, %s211
    %p225 = scmp.eq.s32.totalorder %s23, 1
    %p226 = por %p224, %p225
    %p228 = scmp.ne.s32.totalorder %s211, %s227
    %p229 = scmp.eq.s32.totalorder %s23, 0
    %p230 = por %p228, %p229
    %p231 = scmp.le.s32.totalorder 1, %s17
    %p232 = scmp.lt.s32.totalorder %s17, 3
    %p233 = pnand %p231, %p232
    %p234 = pneg %p233
    // Predicated region
    $region9: #{surrogate_focus_forward.2} parent=5 // pred_check
      _
    $region10: #{surrogate_focus_forward.2} parent=5 // pred_check_branch
      %236 = sbr.rel (%p233) target = $region12
    $region11: #{surrogate_focus_forward.2} parent=5 // pred_region
      %s237 = ssub.s32 %s17, 1
      // Predicated region
      $region13: #{surrogate_focus_forward.2} parent=11 // pred_check
        %p238 = pneg %p174
      $region14: #{surrogate_focus_forward.2} parent=11 // pred_check_branch
        %240 = sbr.rel (%p238) target = $region16
      $region15: #{surrogate_focus_forward.2} parent=11 // pred_region
        _
      $region16: #{surrogate_focus_forward.2} parent=11 // pred_fallthru
        _
      // Predicated region
      $region17: #{surrogate_focus_forward.2} parent=11 // pred_check
        %p241 = pneg %p195
      $region18: #{surrogate_focus_forward.2} parent=11 // pred_check_branch
        %243 = sbr.rel (%p241) target = $region20
      $region19: #{surrogate_focus_forward.2} parent=11 // pred_region
        _
      $region20: #{surrogate_focus_forward.2} parent=11 // pred_fallthru
        _
    $region12: #{surrogate_focus_forward.2} parent=5 // pred_fallthru
      _
    %p244 = scmp.lt.s32.totalorder %s17, 2
    // Predicated region
    $region21: #{surrogate_focus_forward.2} parent=5 // pred_check
      %p245 = pneg %p244
    $region22: #{surrogate_focus_forward.2} parent=5 // pred_check_branch
      %247 = sbr.rel (%p245) target = $region24
    $region23: #{surrogate_focus_forward.2} parent=5 // pred_region
      // Predicated region
      $region25: #{surrogate_focus_forward.2} parent=23 // pred_check
        %p248 = pneg %p55
      $region26: #{surrogate_focus_forward.2} parent=23 // pred_check_branch
        %250 = sbr.rel (%p248) target = $region28
      $region27: #{surrogate_focus_forward.2} parent=23 // pred_region
        %s252 = ssub.s32 1, 0
        %s253 = smul.u32 64, %s252
        %p254 = scmp.lt.s32.totalorder %s24, 1
        %s255 = scalar_select %p254, %s24, 1
        %p256 = scmp.lt.s32.totalorder 0, 0
        %s257 = scalar_select %p256, 0, 0
        %p258 = scmp.lt.s32.totalorder %s25, 0
        %s259 = scalar_select %p258, %s25, 0
        %s260 = sadd.s32 %s259, %s257
        %s261 = sadd.s32 %s260, %s255
        %s262 = smul.addr %s261, 4
        %s263 = scalar_lea.vmem %s2, %s262
        %s265 = ssub.s32 1, 0
        %s266 = smul.u32 64, %s265
      $region28: #{surrogate_focus_forward.2} parent=23 // pred_fallthru
        _
      // Predicated region
      $region29: #{surrogate_focus_forward.2} parent=23 // pred_check
        %p267 = pneg %p87
      $region30: #{surrogate_focus_forward.2} parent=23 // pred_check_branch
        %269 = sbr.rel (%p267) target = $region32
      $region31: #{surrogate_focus_forward.2} parent=23 // pred_region
        %s271 = ssub.s32 1, 0
        %s272 = smul.u32 64, %s271
        %p273 = scmp.lt.s32.totalorder %s24, 1
        %s274 = scalar_select %p273, %s24, 1
        %p275 = scmp.lt.s32.totalorder 0, 0
        %s276 = scalar_select %p275, 0, 0
        %p277 = scmp.lt.s32.totalorder %s25, 0
        %s278 = scalar_select %p277, %s25, 0
        %s279 = sadd.s32 %s278, %s276
        %s280 = sadd.s32 %s279, %s274
        %s281 = smul.addr %s280, 4
        %s282 = scalar_lea.vmem %s4, %s281
        %s284 = ssub.s32 1, 0
        %s285 = smul.u32 64, %s284
      $region32: #{surrogate_focus_forward.2} parent=23 // pred_fallthru
        _
      // Predicated region
      $region33: #{surrogate_focus_forward.2} parent=23 // pred_check
        %p286 = pneg %p119
      $region34: #{surrogate_focus_forward.2} parent=23 // pred_check_branch
        %288 = sbr.rel (%p286) target = $region36
      $region35: #{surrogate_focus_forward.2} parent=23 // pred_region
        %s290 = ssub.s32 1, 0
        %s291 = smul.u32 64, %s290
        %p292 = scmp.lt.s32.totalorder %s24, 1
        %s293 = scalar_select %p292, %s24, 1
        %p294 = scmp.lt.s32.totalorder 0, 0
        %s295 = scalar_select %p294, 0, 0
        %p296 = scmp.lt.s32.totalorder %s25, 0
        %s297 = scalar_select %p296, %s25, 0
        %s298 = sadd.s32 %s297, %s295
        %s299 = sadd.s32 %s298, %s293
        %s300 = smul.addr %s299, 4
        %s301 = scalar_lea.vmem %s5, %s300
        %s303 = ssub.s32 1, 0
        %s304 = smul.u32 64, %s303
      $region36: #{surrogate_focus_forward.2} parent=23 // pred_fallthru
        _
      // Predicated region
      $region37: #{surrogate_focus_forward.2} parent=23 // pred_check
        %p305 = pneg %p147
      $region38: #{surrogate_focus_forward.2} parent=23 // pred_check_branch
        %307 = sbr.rel (%p305) target = $region40
      $region39: #{surrogate_focus_forward.2} parent=23 // pred_region
        %p308 = scmp.lt.s32.totalorder %s24, 1
        %s309 = scalar_select %p308, %s24, 1
        %p310 = scmp.lt.s32.totalorder %s25, 0
        %s311 = scalar_select %p310, %s25, 0
        %s312 = sadd.s32 %s311, %s309
        %s313 = smul.addr %s312, 4
        %s314 = scalar_lea.vmem %s6, %s313
      $region40: #{surrogate_focus_forward.2} parent=23 // pred_fallthru
        _
    $region24: #{surrogate_focus_forward.2} parent=5 // pred_fallthru
      _
    %p315 = scmp.le.s32.totalorder 1, %s17
    %p316 = scmp.lt.s32.totalorder %s17, 3
    %p317 = pnand %p315, %p316
    %p318 = pneg %p317
    // Predicated region
    $region41: #{surrogate_focus_forward.2} parent=5 // pred_check
      _
    $region42: #{surrogate_focus_forward.2} parent=5 // pred_check_branch
      %320 = sbr.rel (%p317) target = $region44
    $region43: #{surrogate_focus_forward.2} parent=5 // pred_region
      #allocation22 [shape = 'u8[8192]{0}', space=vmem, size = 0x2000, dematerialized = true, scoped, tag = 'FusionAdapter Buffer %fusion.1 = f32[2,12,64]{2,1,0:T(8,128)} fusion(%param_2.3, %param_3.2, %param_4.2, %param_5.3, %param_6.2), kind=kLoop, calls=%fused_computation.5.clone, metadata={op_name="jit(surrogate_focus_forward)/concatenate" stack_frame_id=12}']
      %s321 = ssub.s32 %s17, 1
      %s323 = ssub.s32 1, 0
      %s324 = smul.u32 64, %s323
      %p325 = scmp.lt.s32.totalorder %s26, 1
      %s326 = scalar_select %p325, %s26, 1
      %p327 = scmp.lt.s32.totalorder 0, 0
      %s328 = scalar_select %p327, 0, 0
      %p329 = scmp.lt.s32.totalorder %s27, 0
      %s330 = scalar_select %p329, %s27, 0
      %s331 = sadd.s32 %s330, %s328
      %s332 = sadd.s32 %s331, %s326
      %s333 = smul.addr %s332, 4
      %s334 = scalar_lea.vmem %s2, %s333
      %p335 = pneg %p61
      %p336 = pneg %p58
      %s338 = ssub.s32 1, 0
      %s339 = smul.u32 64, %s338
      %p340 = scmp.lt.s32.totalorder %s26, 1
      %s341 = scalar_select %p340, %s26, 1
      %p342 = scmp.lt.s32.totalorder 0, 0
      %s343 = scalar_select %p342, 0, 0
      %p344 = scmp.lt.s32.totalorder %s27, 0
      %s345 = scalar_select %p344, %s27, 0
      %s346 = sadd.s32 %s345, %s343
      %s347 = sadd.s32 %s346, %s341
      %s348 = smul.addr %s347, 4
      %s349 = scalar_lea.vmem %s4, %s348
      %p350 = pneg %p93
      %p351 = pneg %p90
      %s353 = ssub.s32 1, 0
      %s354 = smul.u32 64, %s353
      %p355 = scmp.lt.s32.totalorder %s26, 1
      %s356 = scalar_select %p355, %s26, 1
      %p357 = scmp.lt.s32.totalorder 0, 0
      %s358 = scalar_select %p357, 0, 0
      %p359 = scmp.lt.s32.totalorder %s27, 0
      %s360 = scalar_select %p359, %s27, 0
      %s361 = sadd.s32 %s360, %s358
      %s362 = sadd.s32 %s361, %s356
      %s363 = smul.addr %s362, 4
      %s364 = scalar_lea.vmem %s5, %s363
      %p365 = pneg %p125
      %p366 = pneg %p122
      %p367 = scmp.lt.s32.totalorder %s26, 1
      %s368 = scalar_select %p367, %s26, 1
      %p369 = scmp.lt.s32.totalorder %s27, 0
      %s370 = scalar_select %p369, %s27, 0
      %s371 = sadd.s32 %s370, %s368
      %s372 = smul.addr %s371, 4
      %s373 = scalar_lea.vmem %s6, %s372
      %p374 = pneg %p153
      %p375 = pneg %p150
      %p376 = pneg %p174
      %p377 = pneg %p171
      %p378 = pneg %p195
      %p379 = pneg %p192
      %p380 = pneg %p223
      %p381 = pneg %p220
      %p382 = scmp.lt.s32.totalorder %s26, 1
      %s383 = scalar_select %p382, %s26, 1
      %p384 = scmp.lt.s32.totalorder %s27, 0
      %s385 = scalar_select %p384, %s27, 0
      %s386 = smul.addr %s383, 4
      %s387 = sadd.s32 %s385, %s386
      %s388 = smul.addr %s387, 8
      %s389 = scalar_lea.vmem %s7, %s388
      %s391 = ssub.s32 1, 0
      %s392 = smul.u32 64, %s391
      %p393 = scmp.lt.s32.totalorder %s26, 1
      %s394 = scalar_select %p393, %s26, 1
      %p395 = scmp.lt.s32.totalorder 0, 0
      %s396 = scalar_select %p395, 0, 0
      %p397 = scmp.lt.s32.totalorder %s27, 0
      %s398 = scalar_select %p397, %s27, 0
      %s399 = sadd.s32 %s398, %s396
      %s400 = sadd.s32 %s399, %s394
      %s401 = smul.addr %s400, 4
      %s402 = scalar_lea.vmem %s2, %s401
      %s404 = ssub.s32 1, 0
      %s405 = smul.u32 64, %s404
      %s407 = ssub.s32 1, 0
      %s408 = smul.u32 64, %s407
      %p409 = scmp.lt.s32.totalorder %s26, 1
      %s410 = scalar_select %p409, %s26, 1
      %p411 = scmp.lt.s32.totalorder 0, 0
      %s412 = scalar_select %p411, 0, 0
      %p413 = scmp.lt.s32.totalorder %s27, 0
      %s414 = scalar_select %p413, %s27, 0
      %s415 = sadd.s32 %s414, %s412
      %s416 = sadd.s32 %s415, %s410
      %s417 = smul.addr %s416, 4
      %s418 = scalar_lea.vmem %s4, %s417
      %s420 = ssub.s32 1, 0
      %s421 = smul.u32 64, %s420
      %s423 = ssub.s32 1, 0
      %s424 = smul.u32 64, %s423
      %p425 = scmp.lt.s32.totalorder %s26, 1
      %s426 = scalar_select %p425, %s26, 1
      %p427 = scmp.lt.s32.totalorder 0, 0
      %s428 = scalar_select %p427, 0, 0
      %p429 = scmp.lt.s32.totalorder %s27, 0
      %s430 = scalar_select %p429, %s27, 0
      %s431 = sadd.s32 %s430, %s428
      %s432 = sadd.s32 %s431, %s426
      %s433 = smul.addr %s432, 4
      %s434 = scalar_lea.vmem %s5, %s433
      %s436 = ssub.s32 1, 0
      %s437 = smul.u32 64, %s436
      %p438 = scmp.lt.s32.totalorder %s26, 1
      %s439 = scalar_select %p438, %s26, 1
      %p440 = scmp.lt.s32.totalorder %s27, 0
      %s441 = scalar_select %p440, %s27, 0
      %s442 = sadd.s32 %s441, %s439
      %s443 = smul.addr %s442, 4
      %s444 = scalar_lea.vmem %s6, %s443
      %p445 = scmp.lt.s32.totalorder %s26, 1
      %s446 = scalar_select %p445, %s26, 1
      %p447 = scmp.lt.s32.totalorder %s27, 0
      %s448 = scalar_select %p447, %s27, 0
      %s449 = smul.addr %s446, 4
      %s450 = sadd.s32 %s448, %s449
      %s451 = smul.addr %s450, 8
      %s452 = scalar_lea.vmem %s7, %s451
      %s453 = ssub.s32 0, 0
      %p454 = scmp.lt.s32.totalorder %s453, 0
      %s455 = scalar_select %p454, 0, 255
      %s456 = sand.u32 15, %s455
      %s457 = sand.u32 7, %s456
      %v458 = vld [vmem:[%s402] sm:%s457]
      %s459 = ssub.s32 0, 0
      %p460 = scmp.lt.s32.totalorder %s459, 0
      %s461 = scalar_select %p460, 0, 255
      %s462 = sand.u32 15, %s461
      %s463 = sand.u32 7, %s462
      %v464 = vld [vmem:[%s418] sm:%s463]
      %v465 = vlaneseq
      %v466 = vshrl.u32 %v465, 7
      %v467 = vadd.s32 %v466, 8
      %vm468 = vcmp.lt.s32.totalorder %v467, 11
      %v469 = vsel %vm468, %v464, %v13
      %s470 = smul.addr %s27, 128
      %v471 = vlaneseq
      %v472 = vand.u32 %v471, 127
      %v473 = vstv %s470
      %v474 = vadd.s32 %v472, %v473
      %vm475 = vcmp.lt.s32.totalorder %v474, 64
      %v476 = vsel %vm475, %v469, %v13
      %vm477 = vcmask 1041408
      %v478 = vsel %vm477, %v476, %v13
      %v479 = vrot.slane %v478, 2
      %s480 = ssub.s32 0, 0
      %p481 = scmp.lt.s32.totalorder %s480, 0
      %s482 = scalar_select %p481, 0, 255
      %s483 = sand.u32 15, %s482
      %s484 = sand.u32 7, %s483
      %v485 = vld [vmem:[%s434] sm:%s484]
      %v486 = vlaneseq
      %v487 = vshrl.u32 %v486, 7
      %v488 = vadd.s32 %v487, 8
      %vm489 = vcmp.lt.s32.totalorder %v488, 11
      %v490 = vsel %vm489, %v485, %v14
      %s491 = smul.addr %s27, 128
      %v492 = vlaneseq
      %v493 = vand.u32 %v492, 127
      %v494 = vstv %s491
      %v495 = vadd.s32 %v493, %v494
      %vm496 = vcmp.lt.s32.totalorder %v495, 64
      %v497 = vsel %vm496, %v490, %v14
      %vm498 = vcmask 1044480
      %v499 = vsel %vm498, %v497, %v14
      %v500 = vrot.slane %v499, 5
      %v501 = vld [vmem:[%s444] sm:$0x7]
      %v502 = vlaneseq
      %v503 = vshrl.u32 %v502, 7
      %vm505 = vcmp.lt.s32.totalorder %v503, 3
      %v506 = vsel %vm505, %v501, %v15
      %s507 = smul.addr %s27, 128
      %v508 = vlaneseq
      %v509 = vand.u32 %v508, 127
      %v510 = vstv %s507
      %v511 = vadd.s32 %v509, %v510
      %vm512 = vcmp.lt.s32.totalorder %v511, 64
      %v513 = vsel %vm512, %v506, %v15
      %514 = xla_tuple %v513, %v500
      %515 = xla_tuple %514
      %v516 = vmax.f32 %v513, %v500
      %517 = xla_tuple %v516
      %518 = xla_tuple %v516, %v479
      %519 = xla_tuple %518
      %v520 = vmax.f32 %v516, %v479
      %521 = xla_tuple %v520
      %522 = xla_tuple %v520, %v12
      %523 = xla_tuple %522
      %v524 = vmax.f32 %v520, %v12
      %525 = xla_tuple %v524
      %527 = vst [vmem:[#allocation22] sm:$0xff] %v524
      %v528 = vlaneseq
      %v529 = vshrl.u32 %v528, 7
      %v530 = vadd.s32 %v529, 16
      %vm531 = vcmp.lt.s32.totalorder %v530, 19
      %v532 = vsel %vm531, %v458, %v12
      %s533 = smul.addr %s27, 128
      %v534 = vlaneseq
      %v535 = vand.u32 %v534, 127
      %v536 = vstv %s533
      %v537 = vadd.s32 %v535, %v536
      %vm538 = vcmp.lt.s32.totalorder %v537, 64
      %v539 = vsel %vm538, %v532, %v12
      %vm540 = vcmask 1046528
      %v541 = vsel %vm540, %v539, %v12
      %v542 = vrot.slane %v541, 7
      %vm543 = vcmask 1041408
      %v544 = vsel %vm543, %v13, %v476
      %v545 = vrot.slane %v544, 2
      %vm546 = vcmask 1044480
      %v547 = vsel %vm546, %v14, %v497
      %v548 = vrot.slane %v547, 5
      %549 = xla_tuple %v15, %v548
      %550 = xla_tuple %549
      %v551 = vmax.f32 %v15, %v548
      %552 = xla_tuple %v551
      %553 = xla_tuple %v551, %v545
      %554 = xla_tuple %553
      %v555 = vmax.f32 %v551, %v545
      %556 = xla_tuple %v555
      %557 = xla_tuple %v555, %v542
      %558 = xla_tuple %557
      %v559 = vmax.f32 %v555, %v542
      %560 = xla_tuple %v559
      %s561 = scalar_lea.vmem [#allocation22], 8
      %563 = vst [vmem:[%s561] sm:$0xff] %v559
      %v564 = vld [vmem:[%s0] sm:$0xff]
      %v565 = vld [vmem:[%s0 + $0x8] sm:$0xff]
      %v566 = vld [vmem:[%s0 + $0x10] sm:$0xff]
      %v567 = vld [vmem:[%s0 + $0x18] sm:$0xff]
      %v568 = vld [vmem:[#allocation22] sm:$0xff]
      %v569 = vld [vmem:[#allocation22 + $0x8] sm:$0xf]
      %v570 = vld [vmem:[%s1] sm:$0xff]
      %v571 = vld [vmem:[%s1 + $0x8] sm:$0xff]
      %v572 = vld [vmem:[%s1 + $0x10] sm:$0xff]
      %v573 = vld [vmem:[%s1 + $0x18] sm:$0xff]
      %575 = vset.pattern.permute.xlu0 0
      %576 = vperm.xlu0 %575, %v570
      %v577 = vpop.permute.xlu0 %576
      %580 = vset.pattern.permute.xlu0 0
      %581 = vperm.xlu0 %580, %v571
      %v582 = vpop.permute.xlu0 %581
      %585 = vset.pattern.permute.xlu0 0
      %586 = vperm.xlu0 %585, %v572
      %v587 = vpop.permute.xlu0 %586
      %590 = vset.pattern.permute.xlu0 0
      %591 = vperm.xlu0 %590, %v573
      %v592 = vpop.permute.xlu0 %591
      %vm594 = vcmask 97280
      %v596 = vsel %vm594, %v564, 0
      %v599 = vsel %vm594, %v565, 0
      %v602 = vsel %vm594, %v566, 0
      %v605 = vsel %vm594, %v567, 0
      %vm607 = vcmask 1043456
      %v609 = vsel %vm607, %v569, 0
      %611 = vmatprep.subr.mxu0 0.0
      %612 = vmatpush1.msra.mxu0 %v568
      %613 = vmatprep.subr.mxu0 0.0
      %614 = vmatpush1.msra.mxu0 %v609
      %615 = vmatprep.subr.mxu0 0.0
      %616 = vmatpush1.msra.mxu0 0.0
      %617 = vmatprep.subr.mxu0 0.0
      %618 = vmatpush1.msra.mxu0 0.0
      %619 = vmatprep.subr.mxu0 0.0
      %620 = vmatpush1.msra.mxu0 0.0
      %621 = vmatprep.subr.mxu0 0.0
      %622 = vmatpush1.msra.mxu0 0.0
      %623 = vmatprep.subr.mxu0 0.0
      %624 = vmatpush1.msra.mxu0 0.0
      %625 = vmatprep.subr.mxu0 0.0
      %626 = vmatpush1.msra.mxu0 0.0
      %627 = vmatprep.subr.mxu0 0.0
      %628 = vmatpush1.msra.mxu0 0.0
      %629 = vmatprep.subr.mxu0 0.0
      %630 = vmatpush1.msra.mxu0 0.0
      %631 = vmatprep.subr.mxu0 0.0
      %632 = vmatpush1.msra.mxu0 0.0
      %633 = vmatprep.subr.mxu0 0.0
      %634 = vmatpush1.msra.mxu0 0.0
      %635 = vmatprep.subr.mxu0 0.0
      %636 = vmatpush1.msra.mxu0 0.0
      %637 = vmatprep.subr.mxu0 0.0
      %638 = vmatpush1.msra.mxu0 0.0
      %639 = vmatprep.subr.mxu0 0.0
      %640 = vmatpush1.msra.mxu0 0.0
      %641 = vmatprep.subr.mxu0 0.0
      %642 = vmatpush1.msra.mxu0 0.0
      %643 = vmatprep.subr.mxu0 0.0
      %644 = vmatpush1.msra.mxu0 0.0
      %645 = vmatprep.subr.mxu0 0.0
      %646 = vmatpush1.msra.mxu0 0.0
      %647 = vmatprep.subr.mxu0 0.0
      %648 = vmatpush1.msra.mxu0 0.0
      %649 = vmatprep.subr.mxu0 0.0
      %650 = vmatpush1.msra.mxu0 0.0
      %651 = vmatprep.subr.mxu0 0.0
      %652 = vmatpush1.msra.mxu0 0.0
      %653 = vmatprep.subr.mxu0 0.0
      %654 = vmatpush1.msra.mxu0 0.0
      %655 = vmatprep.subr.mxu0 0.0
      %656 = vmatpush1.msra.mxu0 0.0
      %657 = vmatprep.subr.mxu0 0.0
      %658 = vmatpush1.msra.mxu0 0.0
      %659 = vmatprep.subr.mxu0 0.0
      %660 = vmatpush1.msra.mxu0 0.0
      %661 = vmatprep.subr.mxu0 0.0
      %662 = vmatpush1.msra.mxu0 0.0
      %663 = vmatprep.subr.mxu0 0.0
      %664 = vmatpush1.msra.mxu0 0.0
      %665 = vmatprep.subr.mxu0 0.0
      %666 = vmatpush1.msra.mxu0 0.0
      %667 = vmatprep.subr.mxu0 0.0
      %668 = vmatpush1.msra.mxu0 0.0
      %669 = vmatprep.subr.mxu0 0.0
      %670 = vmatpush1.msra.mxu0 0.0
      %671 = vmatprep.subr.mxu0 0.0
      %672 = vmatpush1.msra.mxu0 0.0
      %673 = vmatprep.subr.mxu0 0.0
      %674 = vmatpush1.msra.mxu0 0.0
      %675 = vmatprep.mubr.f32.mxu0 0.0
      %676 = vmatmul.mubr.f32.gmra.mrb[0].mxu0 %v596
      %v677 = vpop.f32.mrb[0].mxu0
      %v678 = vadd.f32 %v577, %v677
      %v679 = vpop.f32.mrb[0].mxu0
      %680 = vmatprep.mubr.f32.mxu0 0.0
      %681 = vmatmul.mubr.f32.gmra.mrb[0].mxu0 %v599
      %v682 = vpop.f32.mrb[0].mxu0
      %v683 = vadd.f32 %v582, %v682
      %v684 = vpop.f32.mrb[0].mxu0
      %685 = vmatprep.mubr.f32.mxu0 0.0
      %686 = vmatmul.mubr.f32.gmra.mrb[0].mxu0 %v602
      %v687 = vpop.f32.mrb[0].mxu0
      %v688 = vadd.f32 %v587, %v687
      %v689 = vpop.f32.mrb[0].mxu0
      %690 = vmatprep.mubr.f32.mxu0 0.0
      %691 = vmatmul.mubr.f32.gmra.mrb[0].mxu0 %v605
      %v692 = vpop.f32.mrb[0].mxu0
      %v693 = vadd.f32 %v592, %v692
      %v694 = vpop.f32.mrb[0].mxu0
      %695 = vdwg.mxu0
      %v696 = vxor.u32 %v678, 2147483648
      %v697 = vxor.u32 %v683, 2147483648
      %v698 = vxor.u32 %v688, 2147483648
      %v699 = vxor.u32 %v693, 2147483648
      %v700 = vmul.f32 %v696, 1.442695
      %v701 = vpow.pop %v700
      %v702 = vmul.f32 %v697, 1.442695
      %v703 = vpow.pop %v702
      %v704 = vmul.f32 %v698, 1.442695
      %v705 = vpow.pop %v704
      %v706 = vmul.f32 %v699, 1.442695
      %v707 = vpow.pop %v706
      %v708 = vadd.f32 %v701, 1.0
      %v709 = vadd.f32 %v703, 1.0
      %v710 = vadd.f32 %v705, 1.0
      %v711 = vadd.f32 %v707, 1.0
      %v712 = vrcp.pop %v708
      %v713 = vmul.f32 1.0, %v712
      %v714 = vrcp.pop %v709
      %v715 = vmul.f32 1.0, %v714
      %v716 = vrcp.pop %v710
      %v717 = vmul.f32 1.0, %v716
      %v718 = vrcp.pop %v711
      %v719 = vmul.f32 1.0, %v718
      %v720 = vmul.f32 %v678, %v713
      %v721 = vmul.f32 %v683, %v715
      %v722 = vmul.f32 %v688, %v717
      %v723 = vmul.f32 %v693, %v719
      %vm724 = vcmask 523264
      %725 = vst.msk [vmem:[%s452] sm:$0xff] %vm724, %v720
      %726 = vst.msk [vmem:[%s452 + $0x8] sm:$0xff] %vm724, %v721
      %727 = vst.msk [vmem:[%s452 + $0x10] sm:$0xff] %vm724, %v722
      %728 = vst.msk [vmem:[%s452 + $0x18] sm:$0xff] %vm724, %v723
      %p729 = scmp.lt.s32.totalorder %s26, 1
      %s730 = scalar_select %p729, %s26, 1
      %p731 = scmp.lt.s32.totalorder %s27, 0
      %s732 = scalar_select %p731, %s27, 0
      %s733 = smul.addr %s730, 4
      %s734 = sadd.s32 %s732, %s733
      %s735 = smul.addr %s734, 8
      %s736 = scalar_lea.vmem %s7, %s735
      // Predicated region
      $region45: #{surrogate_focus_forward.2} parent=43 // pred_check
        %p737 = pneg %p220
      $region46: #{surrogate_focus_forward.2} parent=43 // pred_check_branch
        %739 = sbr.rel (%p737) target = $region48
      $region47: #{surrogate_focus_forward.2} parent=43 // pred_region
        _
      $region48: #{surrogate_focus_forward.2} parent=43 // pred_fallthru
        _
    $region44: #{surrogate_focus_forward.2} parent=5 // pred_fallthru
      _
    %p740 = scmp.le.s32.totalorder 2, %s17
    // Predicated region
    $region49: #{surrogate_focus_forward.2} parent=5 // pred_check
      %p741 = pneg %p740
    $region50: #{surrogate_focus_forward.2} parent=5 // pred_check_branch
      %743 = sbr.rel (%p741) target = $region52
    $region51: #{surrogate_focus_forward.2} parent=5 // pred_region
      %s744 = ssub.s32 %s17, 2
      // Predicated region
      $region53: #{surrogate_focus_forward.2} parent=51 // pred_check
        %p745 = pneg %p226
      $region54: #{surrogate_focus_forward.2} parent=51 // pred_check_branch
        %747 = sbr.rel (%p745) target = $region56
      $region55: #{surrogate_focus_forward.2} parent=51 // pred_region
        %p748 = scmp.lt.s32.totalorder %s28, 1
        %s749 = scalar_select %p748, %s28, 1
        %p750 = scmp.lt.s32.totalorder %s29, 0
        %s751 = scalar_select %p750, %s29, 0
        %s752 = smul.addr %s749, 4
        %s753 = sadd.s32 %s751, %s752
        %s754 = smul.addr %s753, 8
        %s755 = scalar_lea.vmem %s7, %s754
      $region56: #{surrogate_focus_forward.2} parent=51 // pred_fallthru
        _
    $region52: #{surrogate_focus_forward.2} parent=5 // pred_fallthru
      _
  $region6: #{surrogate_focus_forward.2} parent=0 // loop_footer
    %s21 = sadd.s32 1, %s17
  $region7: #{surrogate_focus_forward.2} parent=0 // loop_footer_branch
    %16 = sbr.rel target = $region3
  $region8: #{surrogate_focus_forward.2} parent=0 // loop_exit
    _

</llo_original>
